<compile_context>
chip_gen: v7x
topology: tpu7x:2x2x1
jax: 0.10.0
libtpu: 0.0.40
codegen_flags: <defaults>
</compile_context>

<pallas_src>
import jax
import jax.numpy as jnp
from jax.experimental import pallas as pl
from jax.experimental.pallas import tpu as pltpu

_LANES = 128
_TR_MAX = 256                    # max row tile (N*C axis)
_BLOCK_BYTES = 4 * 1024 * 1024   # target bytes per input buffer (x2 when double-buffered)


def _cdiv(a, b):
    return (a + b - 1) // b


def _round_up(v, m):
    return _cdiv(v, m) * m


def global_avg_pool1d(x):
    """Equivalent of F.avg_pool1d(x, kernel_size=(x.shape[2],)): (N,C,L) -> (N,C,1)."""
    assert x.ndim == 3, x.shape
    assert jnp.issubdtype(x.dtype, jnp.floating), "avg_pool1d expects a floating dtype"
    n, c, l = x.shape
    r = n * c
    x2 = x.reshape(r, l)
    inv_l = float(1.0 / l)                     # divide by the TRUE length
    itemsize = jnp.dtype(x.dtype).itemsize

    # ---- row tile: full extent for tiny R; otherwise >= 2 blocks (v7x megacore),
    #      a multiple of 16 (sublane-friendly for f32 and bf16), capped at 256.
    if r <= 16:
        tr = r
    else:
        tr = min(_TR_MAX, _round_up(_cdiv(r, 2), 16))
    grid_r = _cdiv(r, tr)

    # ---- length tile: full extent if it fits the byte budget (single step, no
    #      mask); otherwise a multiple of 128 sized for ~4 MiB per buffer.
    tl_budget = max(_LANES, ((_BLOCK_BYTES // (tr * itemsize)) // _LANES) * _LANES)

    out_shape = jax.ShapeDtypeStruct((r, 1), x.dtype)
    vmem_limit = 32 * 1024 * 1024              # safe on v5e/v6e (128 MiB) and v7x (64 MiB)

    if l <= tl_budget:
        # -------- Path A: single length step, full-extent length block. --------
        def kernel1(x_ref, o_ref):
            xt = x_ref[...].astype(jnp.float32)
            o_ref[...] = (jnp.sum(xt, axis=-1, keepdims=True) * inv_l).astype(o_ref.dtype)

        out2 = pl.pallas_call(
            kernel1,
            out_shape=out_shape,
            grid_spec=pltpu.PrefetchScalarGridSpec(
                num_scalar_prefetch=0,
                grid=(grid_r,),
                in_specs=[pl.BlockSpec((tr, l), lambda i: (i, 0))],
                out_specs=pl.BlockSpec((tr, 1), lambda i: (i, 0)),
            ),
            compiler_params=pltpu.CompilerParams(
                dimension_semantics=("parallel",),
                vmem_limit_bytes=vmem_limit,
            ),
        )(x2)
    else:
        # -------- Path B: streamed reduction over the length axis. --------
        tl = tl_budget                         # multiple of 128 by construction
        grid_k = _cdiv(l, tl)
        lane_blocks = tl // _LANES
        need_mask = (l % tl) != 0

        def kernel2(x_ref, o_ref, acc_ref):
            k = pl.program_id(1)

            @pl.when(k == 0)
            def _init():
                acc_ref[...] = jnp.zeros_like(acc_ref)

            xt = x_ref[...].astype(jnp.float32)
            if need_mask:
                # Mask columns beyond the true L (only the last block is partial;
                # for all other blocks the mask is trivially all-true).
                col = jax.lax.broadcasted_iota(jnp.int32, (tr, tl), 1) + k * tl
                xt = jnp.where(col < l, xt, jnp.float32(0.0))

            # Unrolled static 128-wide lane slices: pure VALU adds, no relayout,
            # single acc read-modify-write per grid step.
            s = xt[:, 0:_LANES]
            for b in range(1, lane_blocks):
                s = s + xt[:, b * _LANES:(b + 1) * _LANES]
            acc_ref[...] += s

            @pl.when(k == pl.num_programs(1) - 1)
            def _finalize():
                row_sum = jnp.sum(acc_ref[...], axis=-1, keepdims=True)  # one XLU reduce
                o_ref[...] = (row_sum * inv_l).astype(o_ref.dtype)

        out2 = pl.pallas_call(
            kernel2,
            out_shape=out_shape,
            grid_spec=pltpu.PrefetchScalarGridSpec(
                num_scalar_prefetch=0,
                grid=(grid_r, grid_k),
                in_specs=[pl.BlockSpec((tr, tl), lambda i, k: (i, k))],
                out_specs=pl.BlockSpec((tr, 1), lambda i, k: (i, 0)),
                scratch_shapes=[pltpu.VMEM((tr, _LANES), jnp.float32)],
            ),
            compiler_params=pltpu.CompilerParams(
                dimension_semantics=("parallel", "arbitrary"),
                vmem_limit_bytes=vmem_limit,
            ),
        )(x2)

    return out2.reshape(n, c, 1)


if __name__ == "__main__":
    key = jax.random.PRNGKey(0)
    # NCL 1-D feature map: batch=2, channels=4, length=16
    N, C, L = 2, 4, 16
    x = jax.random.normal(key, (N, C, L), dtype=jnp.float32)

    out = global_avg_pool1d(x)
    out = jax.block_until_ready(out)

    ref = jnp.mean(x, axis=2, keepdims=True)
    assert out.shape == (N, C, 1), out.shape
    assert jnp.allclose(out, ref, atol=1e-5, rtol=1e-5), "mismatch vs reference"

    print("KERNEL_OK")
</pallas_src>

<mosaic_0001>
module attributes {stable_mosaic.version = 11 : i64} {
  func.func @kernel1(%arg0: i32, %arg1: memref<8x16xf32, #tpu.memory_space<vmem>>, %arg2: memref<8x1xf32, #tpu.memory_space<vmem>>) attributes {dimension_semantics = [#tpu.dimension_semantics<parallel>], iteration_bounds = array<i64: 1>, scalar_prefetch = 0 : i64, scratch_operands = 0 : i64, tpu.core_type = #tpu.core_type<tc>, window_params = [{transform_indices = @transform_0, window_bounds = array<i64: 8, 16>}, {transform_indices = @transform_1, window_bounds = array<i64: 8, 1>}]} {
    %c0 = arith.constant 0 : index
    %c0_0 = arith.constant 0 : index
    %0 = vector.load %arg1[%c0, %c0_0] : memref<8x16xf32, #tpu.memory_space<vmem>>, vector<8x16xf32>
    %cst = arith.constant dense<0.000000e+00> : vector<8xf32>
    %1 = vector.multi_reduction <add>, %0, %cst [1] : vector<8x16xf32> to vector<8xf32>
    %2 = vector.shape_cast %1 : vector<8xf32> to vector<8x1xf32>
    %cst_1 = arith.constant 6.250000e-02 : f32
    %3 = vector.broadcast %cst_1 : f32 to vector<8x1xf32>
    %4 = arith.mulf %2, %3 : vector<8x1xf32>
    %c0_2 = arith.constant 0 : index
    %c0_3 = arith.constant 0 : index
    %5 = vector.load %arg2[%c0_2, %c0_3] : memref<8x1xf32, #tpu.memory_space<vmem>>, vector<8x1xf32>
    tpu.vector_store %arg2[%c0_2, %c0_3], %4 {strides = array<i32>} : memref<8x1xf32, #tpu.memory_space<vmem>>, vector<8x1xf32>,
    return
  }
  func.func @transform_0(%arg0: i32) -> (i32, i32) {
    %c0_i32 = arith.constant 0 : i32
    %c0_i32_0 = arith.constant 0 : i32
    return %arg0, %c0_i32 : i32, i32
  }
  func.func @transform_1(%arg0: i32) -> (i32, i32) {
    %c0_i32 = arith.constant 0 : i32
    %c0_i32_0 = arith.constant 0 : i32
    return %arg0, %c0_i32 : i32, i32
  }
}

</mosaic_0001>

<llo_original>
// kernel: tpu_custom_call.1
$region0: #{tpu_custom_call.1}
  #allocation0 [shape = 'u32[]', space=smem, size = 0x4, offset = 0x4, fixed_abs, tag = 'smem constant byte address 0x4 - core index']
  #allocation1 [shape = 'u32[144,128]{1,0:T(1,128)}', space=vmem, size = 0x12000, scoped, tag = 'internal scratch']
  %s0 = inlined_call_operand.hbm [shape: f32[8,16], index: 0, kind: input, shape index: {}]
  %s1 = inlined_call_operand.vmem [shape: f32[8,1], index: 1, kind: output, shape index: {}]
  %s2 = sld [smem:[#allocation0]]
  $region18: #{tpu_custom_call.1} parent=0
    _
  %s4 = ssub.s32 1, %s2
  %s5 = scalar_select 0, %s4, %s2
  $region1: #{tpu_custom_call.1} parent=0
    #allocation2 [shape = 'u8[4096]{0}', space=vmem, size = 0x1000, scoped, tag = 'input window, operand 0, single buffered']
    #allocation3 [shape = 's32[1]{0}', space=sflag, size = 0x4, scoped, tag = 'scoped memory for tpu_custom_call.1']
    %6 = vsyncpa [#allocation3], 0
    // Predicated region
    $region2: #{tpu_custom_call.1} parent=1 // pred_check
      _
    $region3: #{tpu_custom_call.1} parent=1 // pred_check_branch
      %8 = sbr.rel (0) target = $region5
    $region4: #{tpu_custom_call.1} parent=1 // pred_region
      %s10 = ssub.s32 128, 128
      %11 = vsyncadd [#allocation3], %s10
      %s13 = sshll.u32 [#allocation2], 4
      %s14 = int_to_ptr.vmem [resolvable:$true] %s13
      %16 = dma.hbm_to_vmem [thread:$0]  %s0, 128, %s14, [#allocation3]
    $region5: #{tpu_custom_call.1} parent=1 // pred_fallthru
      _
    // Predicated region
    $region6: #{tpu_custom_call.1} parent=1 // pred_check
      _
    $region7: #{tpu_custom_call.1} parent=1 // pred_check_branch
      %18 = sbr.rel (0) target = $region9
    $region8: #{tpu_custom_call.1} parent=1 // pred_region
      %19 = dma.done [#allocation3], 128
    $region9: #{tpu_custom_call.1} parent=1 // pred_fallthru
      _
    %v20 = vld [vmem:[#allocation2] sm:$0xff]
    %vm21 = vcmask 130048
    %v22 = vsel %vm21, %v20, 0.0
    %23 = vadd.xlane.f32.xlu0 %v22
    %v24 = vpop.xlane.xlu0 %23
    %v25 = vmul.f32 %v24, 0.0625
    %vm26 = vcmask 7168
    %27 = vst.msk [vmem:[%s1] sm:$0xff] %vm26, %v25
    // Predicated region
    $region10: #{tpu_custom_call.1} parent=1 // pred_check
      _
    $region11: #{tpu_custom_call.1} parent=1 // pred_check_branch
      %29 = sbr.rel (0) target = $region13
    $region12: #{tpu_custom_call.1} parent=1 // pred_region
      _
    $region13: #{tpu_custom_call.1} parent=1 // pred_fallthru
      _
    // Predicated region
    $region14: #{tpu_custom_call.1} parent=1 // pred_check
      _
    $region15: #{tpu_custom_call.1} parent=1 // pred_check_branch
      %31 = sbr.rel (0) target = $region17
    $region16: #{tpu_custom_call.1} parent=1 // pred_region
      _
    $region17: #{tpu_custom_call.1} parent=1 // pred_fallthru
      _
    %32 = vsyncpa [#allocation3], 1

</llo_original>
